<compile_context>
chip_gen: v7x
topology: tpu7x:2x2x1
jax: 0.10.0
libtpu: 0.0.40
codegen_flags: <defaults>
</compile_context>

<pallas_src>
import functools

import jax
import jax.numpy as jnp
from jax.experimental import pallas as pl
from jax.experimental.pallas import tpu as pltpu


def focal_loss_kernel(logits_ref, targets_ref, alpha_ref, out_ref, acc_ref, *,
                      gamma, total_n, tile_n, blocks_per_core):
    core = pl.program_id(0)
    i = pl.program_id(1)

    @pl.when(i == 0)
    def _():
        acc_ref[...] = jnp.zeros_like(acc_ref)

    x = logits_ref[...].astype(jnp.float32)          # (TN, C)
    tgt = targets_ref[...]                           # (TN, 1) int32
    alpha = alpha_ref[...].astype(jnp.float32)       # (1, C)

    tn, c = x.shape

    # Target-class mask (classes live on lanes).  Selects (not one-hot
    # cast+mul) keep the per-element VALU work down.
    class_ids = jax.lax.broadcasted_iota(jnp.int32, (tn, c), 1)
    mask = class_ids == tgt                                        # (TN, C)

    # Numerically-stable log-softmax / cross-entropy.
    m = jnp.max(x, axis=-1, keepdims=True)                         # (TN, 1)
    lse = jnp.log(jnp.sum(jnp.exp(x - m), axis=-1, keepdims=True)) + m
    target_logit = jnp.sum(jnp.where(mask, x, 0.0), axis=-1, keepdims=True)
    ce = jnp.maximum(lse - target_logit, 0.0)   # clamp ulp-negative ce

    # Focal modulation.  om = 1 - pt, clipped so rounding can never hand a
    # negative base to the pow / multiply chain.
    pt = jnp.exp(-ce)
    om = jnp.clip(1.0 - pt, 0.0, 1.0)
    g = float(gamma)
    if g == int(g) and 0 <= int(g) <= 8:
        # Integer gamma: unrolled VPU multiply chain instead of float pow
        # (pow = log+exp on the single EUP and is NaN-prone near om==0).
        mod = jnp.ones_like(om)
        for _ in range(int(g)):
            mod = mod * om
    else:
        mod = om ** jnp.float32(g)
    focal = mod * ce                                               # (TN, 1)

    # alpha_t = alpha[targets] via the same select/reduce.
    alpha_t = jnp.sum(jnp.where(mask, alpha, 0.0), axis=-1, keepdims=True)
    focal = alpha_t * focal

    # Zero out garbage / duplicated rows (global row index >= total_n).
    global_block = core * blocks_per_core + i
    row_ids = global_block * tile_n + jax.lax.broadcasted_iota(
        jnp.int32, (tn, 1), 0)
    focal = jnp.where(row_ids < total_n, focal, 0.0)

    # Accumulate this core's partial sum; finalize on the core's last step.
    acc_ref[...] += jnp.sum(focal, axis=0, keepdims=True)          # (1, 1)

    @pl.when(i == pl.num_programs(1) - 1)
    def _():
        out_ref[...] = jnp.broadcast_to(acc_ref[...], out_ref.shape)


def focal_loss(logits, targets, alpha=None, gamma=2.0, tile_n=None):
    """logits: (N, C) f32/bf16, targets: (N,) int, alpha: (C,) or None -> f32 scalar."""
    n, c = logits.shape
    itemsize = jnp.dtype(logits.dtype).itemsize
    sublane = {4: 8, 2: 16, 1: 32}.get(itemsize, 8)
    lane_c = pl.cdiv(c, 128) * 128          # VMEM lane-padded class width

    # Generation-aware VMEM budget: ~40 MiB on v7x (64 MiB physical/TC),
    # 64 MiB on v5e/v6e (128 MiB physical).
    try:
        vmem_cap = int(pltpu.get_tpu_info().vmem_capacity_bytes)
    except Exception:  # pragma: no cover - conservative fallback
        vmem_cap = 64 * 1024 * 1024
    vmem_limit = min(vmem_cap * 5 // 8, 64 * 1024 * 1024)
    vmem_limit = max(vmem_limit, 16 * 1024 * 1024)

    if tile_n is None:
        # Bytes-driven tile: account for double-buffered lane-padded logits,
        # the lane-padded (tile_n,1) int32 targets buffer (~512 B/row), and the
        # kernel body's f32 temporaries, then spend ~half the VMEM limit.
        bytes_per_row = (2 * lane_c * itemsize      # 2x logits tile (lane pad)
                         + 2 * 128 * 4              # 2x targets tile (lane pad)
                         + 6 * lane_c * 4           # (TN, C) f32 temporaries
                         + 6 * 128 * 4)             # (TN, 1) f32 temporaries
        tile_n = max(sublane, (vmem_limit // 2) // bytes_per_row)
    # Round to the sublane multiple and don't exceed (rounded-up) N.
    tile_n = max(sublane, (tile_n // sublane) * sublane)
    tile_n = min(tile_n, pl.cdiv(n, sublane) * sublane)

    n_blocks = pl.cdiv(n, tile_n)
    num_cores = 2 if n_blocks > 1 else 1            # v7x megacore split
    blocks_per_core = pl.cdiv(n_blocks, num_cores)

    targets2d = targets.reshape(n, 1).astype(jnp.int32)
    if alpha is None:
        alpha2d = jnp.ones((1, c), jnp.float32)
    else:
        alpha2d = alpha.reshape(1, c).astype(jnp.float32)

    def block_idx(core, i):
        # Clamp duplicated tail blocks in-bounds; the in-kernel row mask
        # (computed from the *unclamped* global block) zeros their rows.
        return jnp.minimum(core * blocks_per_core + i, n_blocks - 1)

    out = pl.pallas_call(
        functools.partial(
            focal_loss_kernel, gamma=gamma, total_n=n, tile_n=tile_n,
            blocks_per_core=blocks_per_core),
        out_shape=jax.ShapeDtypeStruct((num_cores * 8, 128), jnp.float32),
        grid=(num_cores, blocks_per_core),
        in_specs=[
            pl.BlockSpec((tile_n, c), lambda core, i: (block_idx(core, i), 0)),
            pl.BlockSpec((tile_n, 1), lambda core, i: (block_idx(core, i), 0)),
            pl.BlockSpec((1, c), lambda core, i: (0, 0)),   # alpha (resident)
        ],
        out_specs=pl.BlockSpec((8, 128), lambda core, i: (core, 0)),
        scratch_shapes=[pltpu.VMEM((1, 1), jnp.float32)],
        compiler_params=pltpu.CompilerParams(
            dimension_semantics=("parallel", "arbitrary"),
            vmem_limit_bytes=int(vmem_limit),
        ),
    )(logits, targets2d, alpha2d)

    # Sum the per-core partial sums and take the mean over the true N.
    return jnp.sum(out[0::8, 0]) * jnp.float32(1.0 / n)


def focal_loss_ref(logits, targets, alpha=None, gamma=2.0):
    """Pure-JAX reference matching the PyTorch module (reduction='mean')."""
    logp = jax.nn.log_softmax(logits.astype(jnp.float32), axis=-1)
    ce = -jnp.take_along_axis(logp, targets[:, None], axis=-1)[:, 0]
    pt = jnp.exp(-ce)
    focal = (1.0 - pt) ** gamma * ce
    if alpha is not None:
        focal = alpha[targets] * focal
    return jnp.mean(focal)


if __name__ == "__main__":
    key = jax.random.PRNGKey(0)
    gamma = 2.0

    # Case 1: small shapes matching the module's expected use (N=8, C=16).
    N, C = 8, 16
    k1, k2 = jax.random.split(key)
    logits = jax.random.normal(k1, (N, C), dtype=jnp.float32)
    targets = jax.random.randint(k2, (N,), 0, C, dtype=jnp.int32)
    alpha = jnp.linspace(0.25, 1.0, C, dtype=jnp.float32)

    out = jax.block_until_ready(focal_loss(logits, targets, alpha, gamma))
    ref = focal_loss_ref(logits, targets, alpha, gamma)
    assert jnp.allclose(out, ref, atol=1e-5, rtol=1e-5), (out, ref)

    # Case 2: exercise the megacore split + ragged-tail masking with no pad
    # (N=50, C=128, tile_n=16 -> 4 blocks over 2 "cores").
    N2, C2 = 50, 128
    k3, k4, k5 = jax.random.split(k1, 3)
    logits2 = jax.random.normal(k3, (N2, C2), dtype=jnp.float32)
    targets2 = jax.random.randint(k4, (N2,), 0, C2, dtype=jnp.int32)
    alpha2 = jax.random.uniform(k5, (C2,), dtype=jnp.float32, minval=0.1,
                                maxval=1.0)

    out2 = jax.block_until_ready(
        focal_loss(logits2, targets2, alpha2, gamma, tile_n=16))
    ref2 = focal_loss_ref(logits2, targets2, alpha2, gamma)
    assert jnp.allclose(out2, ref2, atol=1e-5, rtol=1e-5), (out2, ref2)

    # Case 3: alpha=None and non-integer gamma (pow path).
    out3 = jax.block_until_ready(
        focal_loss(logits2, targets2, None, 2.5, tile_n=16))
    ref3 = focal_loss_ref(logits2, targets2, None, 2.5)
    assert jnp.allclose(out3, ref3, atol=1e-5, rtol=1e-5), (out3, ref3)

    print("KERNEL_OK")
</pallas_src>

<mosaic_0001>
module attributes {stable_mosaic.version = 11 : i64} {
  func.func @focal_loss_kernel(%arg0: i32, %arg1: i32, %arg2: memref<8x16xf32, #tpu.memory_space<vmem>>, %arg3: memref<8x1xi32, #tpu.memory_space<vmem>>, %arg4: memref<1x16xf32, #tpu.memory_space<vmem>>, %arg5: memref<8x128xf32, #tpu.memory_space<vmem>>, %arg6: memref<1x1xf32, #tpu.memory_space<vmem>>) attributes {dimension_semantics = [#tpu.dimension_semantics<parallel>, #tpu.dimension_semantics<arbitrary>], iteration_bounds = array<i64: 1, 1>, scalar_prefetch = 0 : i64, scratch_operands = 1 : i64, tpu.core_type = #tpu.core_type<tc>, window_params = [{transform_indices = @transform_0, window_bounds = array<i64: 8, 16>}, {transform_indices = @transform_1, window_bounds = array<i64: 8, 1>}, {pipeline_mode = #tpu.pipeline_mode<synchronous>, transform_indices = @transform_2, window_bounds = array<i64: 1, 16>}, {transform_indices = @transform_3, window_bounds = array<i64: 8, 128>}]} {
    %c0_i32 = arith.constant 0 : i32
    %0 = arith.cmpi eq, %arg1, %c0_i32 : i32
    %1 = arith.extui %0 : i1 to i32
    %c0_i32_0 = arith.constant 0 : i32
    %2 = arith.cmpi ne, %1, %c0_i32_0 : i32
    scf.if %2 {
      %cst_26 = arith.constant 0.000000e+00 : f32
      %63 = vector.broadcast %cst_26 : f32 to vector<1x1xf32>
      %c0_27 = arith.constant 0 : index
      %c0_28 = arith.constant 0 : index
      %64 = vector.load %arg6[%c0_27, %c0_28] : memref<1x1xf32, #tpu.memory_space<vmem>>, vector<1x1xf32>
      tpu.vector_store %arg6[%c0_27, %c0_28], %63 {strides = array<i32>} : memref<1x1xf32, #tpu.memory_space<vmem>>, vector<1x1xf32>,
    } else {
    }
    %c0 = arith.constant 0 : index
    %c0_1 = arith.constant 0 : index
    %3 = vector.load %arg2[%c0, %c0_1] : memref<8x16xf32, #tpu.memory_space<vmem>>, vector<8x16xf32>
    %c0_2 = arith.constant 0 : index
    %c0_3 = arith.constant 0 : index
    %4 = vector.load %arg3[%c0_2, %c0_3] : memref<8x1xi32, #tpu.memory_space<vmem>>, vector<8x1xi32>
    %c0_4 = arith.constant 0 : index
    %c0_5 = arith.constant 0 : index
    %5 = vector.load %arg4[%c0_4, %c0_5] : memref<1x16xf32, #tpu.memory_space<vmem>>, vector<1x16xf32>
    %6 = tpu.iota {dimensions = array<i32: 1>} : vector<8x16xi32>
    %7 = vector.broadcast %4 : vector<8x1xi32> to vector<8x16xi32>
    %8 = arith.cmpi eq, %6, %7 : vector<8x16xi32>
    %cst = arith.constant dense<0xFF800000> : vector<8xf32>
    %9 = vector.multi_reduction <maximumf>, %3, %cst [1] : vector<8x16xf32> to vector<8xf32>
    %10 = vector.shape_cast %9 : vector<8xf32> to vector<8x1xf32>
    %11 = vector.broadcast %10 : vector<8x1xf32> to vector<8x16xf32>
    %12 = arith.subf %3, %11 : vector<8x16xf32>
    %13 = math.exp %12 : vector<8x16xf32>
    %cst_6 = arith.constant dense<0.000000e+00> : vector<8xf32>
    %14 = vector.multi_reduction <add>, %13, %cst_6 [1] : vector<8x16xf32> to vector<8xf32>
    %15 = vector.shape_cast %14 : vector<8xf32> to vector<8x1xf32>
    %16 = math.log %15 : vector<8x1xf32>
    %17 = arith.addf %16, %10 : vector<8x1xf32>
    %cst_7 = arith.constant 0.000000e+00 : f32
    %18 = vector.broadcast %cst_7 : f32 to vector<8x16xf32>
    %19 = arith.select %8, %3, %18 : vector<8x16xi1>, vector<8x16xf32>
    %cst_8 = arith.constant dense<0.000000e+00> : vector<8xf32>
    %20 = vector.multi_reduction <add>, %19, %cst_8 [1] : vector<8x16xf32> to vector<8xf32>
    %21 = vector.shape_cast %20 : vector<8xf32> to vector<8x1xf32>
    %22 = arith.subf %17, %21 : vector<8x1xf32>
    %cst_9 = arith.constant 0.000000e+00 : f32
    %23 = vector.broadcast %cst_9 : f32 to vector<8x1xf32>
    %24 = arith.maximumf %22, %23 : vector<8x1xf32>
    %cst_10 = arith.constant 0.000000e+00 : f32
    %25 = vector.broadcast %cst_10 : f32 to vector<8x1xf32>
    %26 = arith.subf %25, %24 : vector<8x1xf32>
    %27 = math.exp %26 : vector<8x1xf32>
    %cst_11 = arith.constant 1.000000e+00 : f32
    %28 = vector.broadcast %cst_11 : f32 to vector<8x1xf32>
    %29 = arith.subf %28, %27 : vector<8x1xf32>
    %cst_12 = arith.constant 0.000000e+00 : f32
    %cst_13 = arith.constant 1.000000e+00 : f32
    %30 = vector.broadcast %cst_12 : f32 to vector<8x1xf32>
    %31 = arith.maximumf %30, %29 : vector<8x1xf32>
    %32 = vector.broadcast %cst_13 : f32 to vector<8x1xf32>
    %33 = arith.minimumf %32, %31 : vector<8x1xf32>
    %cst_14 = arith.constant 1.000000e+00 : f32
    %34 = vector.broadcast %cst_14 : f32 to vector<8x1xf32>
    %35 = arith.mulf %34, %33 : vector<8x1xf32>
    %36 = arith.mulf %35, %33 : vector<8x1xf32>
    %37 = arith.mulf %36, %24 : vector<8x1xf32>
    %cst_15 = arith.constant 0.000000e+00 : f32
    %38 = vector.shape_cast %5 : vector<1x16xf32> to vector<1x16xf32>
    %39 = vector.broadcast %38 : vector<1x16xf32> to vector<8x16xf32>
    %40 = vector.broadcast %cst_15 : f32 to vector<8x16xf32>
    %41 = arith.select %8, %39, %40 : vector<8x16xi1>, vector<8x16xf32>
    %cst_16 = arith.constant dense<0.000000e+00> : vector<8xf32>
    %42 = vector.multi_reduction <add>, %41, %cst_16 [1] : vector<8x16xf32> to vector<8xf32>
    %43 = vector.shape_cast %42 : vector<8xf32> to vector<8x1xf32>
    %44 = arith.mulf %43, %37 : vector<8x1xf32>
    %c1_i32 = arith.constant 1 : i32
    %45 = arith.muli %arg0, %c1_i32 : i32
    %46 = arith.addi %45, %arg1 : i32
    %c8_i32 = arith.constant 8 : i32
    %47 = arith.muli %46, %c8_i32 : i32
    %48 = tpu.iota {dimensions = array<i32: 0>} : vector<8x1xi32>
    %49 = vector.broadcast %47 : i32 to vector<8x1xi32>
    %50 = arith.addi %49, %48 : vector<8x1xi32>
    %c8_i32_17 = arith.constant 8 : i32
    %51 = vector.broadcast %c8_i32_17 : i32 to vector<8x1xi32>
    %52 = arith.cmpi slt, %50, %51 : vector<8x1xi32>
    %cst_18 = arith.constant 0.000000e+00 : f32
    %53 = vector.broadcast %cst_18 : f32 to vector<8x1xf32>
    %54 = arith.select %52, %44, %53 : vector<8x1xi1>, vector<8x1xf32>
    %c0_19 = arith.constant 0 : index
    %c0_20 = arith.constant 0 : index
    %55 = vector.load %arg6[%c0_19, %c0_20] : memref<1x1xf32, #tpu.memory_space<vmem>>, vector<1x1xf32>
    %cst_21 = arith.constant dense<0.000000e+00> : vector<1xf32>
    %56 = vector.multi_reduction <add>, %54, %cst_21 [0] : vector<8x1xf32> to vector<1xf32>
    %57 = vector.shape_cast %56 : vector<1xf32> to vector<1x1xf32>
    %58 = arith.addf %55, %57 : vector<1x1xf32>
    %c0_22 = arith.constant 0 : index
    %c0_23 = arith.constant 0 : index
    %59 = vector.load %arg6[%c0_22, %c0_23] : memref<1x1xf32, #tpu.memory_space<vmem>>, vector<1x1xf32>
    tpu.vector_store %arg6[%c0_22, %c0_23], %58 {strides = array<i32>} : memref<1x1xf32, #tpu.memory_space<vmem>>, vector<1x1xf32>,
    %c0_i32_24 = arith.constant 0 : i32
    %60 = arith.cmpi eq, %arg1, %c0_i32_24 : i32
    %61 = arith.extui %60 : i1 to i32
    %c0_i32_25 = arith.constant 0 : i32
    %62 = arith.cmpi ne, %61, %c0_i32_25 : i32
    scf.if %62 {
      %c0_26 = arith.constant 0 : index
      %c0_27 = arith.constant 0 : index
      %63 = vector.load %arg6[%c0_26, %c0_27] : memref<1x1xf32, #tpu.memory_space<vmem>>, vector<1x1xf32>
      %64 = vector.shape_cast %63 : vector<1x1xf32> to vector<1x1xf32>
      %65 = vector.broadcast %64 : vector<1x1xf32> to vector<8x128xf32>
      %c0_28 = arith.constant 0 : index
      %c0_29 = arith.constant 0 : index
      %66 = vector.load %arg5[%c0_28, %c0_29] : memref<8x128xf32, #tpu.memory_space<vmem>>, vector<8x128xf32>
      tpu.vector_store %arg5[%c0_28, %c0_29], %65 {strides = array<i32>} : memref<8x128xf32, #tpu.memory_space<vmem>>, vector<8x128xf32>,
    } else {
    }
    return
  }
  func.func @transform_0(%arg0: i32, %arg1: i32) -> (i32, i32) {
    %c1_i32 = arith.constant 1 : i32
    %0 = arith.muli %arg0, %c1_i32 : i32
    %1 = arith.addi %0, %arg1 : i32
    %c0_i32 = arith.constant 0 : i32
    %2 = arith.minsi %1, %c0_i32 : i32
    %c0_i32_0 = arith.constant 0 : i32
    %c0_i32_1 = arith.constant 0 : i32
    return %2, %c0_i32_0 : i32, i32
  }
  func.func @transform_1(%arg0: i32, %arg1: i32) -> (i32, i32) {
    %c1_i32 = arith.constant 1 : i32
    %0 = arith.muli %arg0, %c1_i32 : i32
    %1 = arith.addi %0, %arg1 : i32
    %c0_i32 = arith.constant 0 : i32
    %2 = arith.minsi %1, %c0_i32 : i32
    %c0_i32_0 = arith.constant 0 : i32
    %c0_i32_1 = arith.constant 0 : i32
    return %2, %c0_i32_0 : i32, i32
  }
  func.func @transform_2(%arg0: i32, %arg1: i32) -> (i32, i32) {
    %c0_i32 = arith.constant 0 : i32
    %c0_i32_0 = arith.constant 0 : i32
    %c0_i32_1 = arith.constant 0 : i32
    return %c0_i32, %c0_i32_0 : i32, i32
  }
  func.func @transform_3(%arg0: i32, %arg1: i32) -> (i32, i32) {
    %c0_i32 = arith.constant 0 : i32
    %c0_i32_0 = arith.constant 0 : i32
    return %arg0, %c0_i32 : i32, i32
  }
}

</mosaic_0001>

<llo_original>
// kernel: tpu_custom_call.1
$region0: #{tpu_custom_call.1}
  #allocation0 [shape = 'u32[]', space=smem, size = 0x4, offset = 0x4, fixed_abs, tag = 'smem constant byte address 0x4 - core index']
  #allocation1 [shape = 'u32[144,128]{1,0:T(1,128)}', space=vmem, size = 0x12000, scoped, tag = 'internal scratch']
  #allocation2 [shape = 'f32[1,1]{1,0:T(1,128)}', space=vmem, size = 0x200, scoped, tag = 'scratch operand']
  %s0 = inlined_call_operand.vmem [shape: f32[8,16], index: 0, kind: input, shape index: {}]
  %s1 = inlined_call_operand.vmem [shape: s32[8,1], index: 1, kind: input, shape index: {}]
  %s2 = inlined_call_operand.vmem [shape: f32[1,16], index: 2, kind: input, shape index: {}]
  %s3 = inlined_call_operand.hbm [shape: f32[8,128], index: 3, kind: output, shape index: {}]
  %s4 = sld [smem:[#allocation0]]
  $region30: #{tpu_custom_call.1} parent=0
    _
  %s6 = ssub.s32 1, %s4
  %s7 = scalar_select 0, %s6, %s4
  $region1: #{tpu_custom_call.1} parent=0
    #allocation3 [shape = 'u8[4096]{0}', space=vmem, size = 0x1000, scoped, tag = 'output window, operand 0, single buffered']
    #allocation4 [shape = 's32[1]{0}', space=sflag, size = 0x4, scoped, tag = 'scoped memory for tpu_custom_call.1']
    %8 = vsyncpa [#allocation4], 0
    // Predicated region
    $region2: #{tpu_custom_call.1} parent=1 // pred_check
      _
    $region3: #{tpu_custom_call.1} parent=1 // pred_check_branch
      %10 = sbr.rel (0) target = $region5
    $region4: #{tpu_custom_call.1} parent=1 // pred_region
      %s11 = sadd.s32 0, 0
      %p12 = scmp.lt.s32.totalorder %s11, 0
      %s13 = scalar_select %p12, %s11, 0
      %p14 = scmp.lt.s32.totalorder %s13, 0
      %s15 = scalar_select %p14, %s13, 0
      %s16 = smul.addr %s15, 8
      %s17 = scalar_lea.vmem %s0, %s16
      %s18 = sadd.s32 0, 0
      %p19 = scmp.lt.s32.totalorder %s18, 0
      %s20 = scalar_select %p19, %s18, 0
    $region5: #{tpu_custom_call.1} parent=1 // pred_fallthru
      _
    // Predicated region
    $region6: #{tpu_custom_call.1} parent=1 // pred_check
      _
    $region7: #{tpu_custom_call.1} parent=1 // pred_check_branch
      %22 = sbr.rel (0) target = $region9
    $region8: #{tpu_custom_call.1} parent=1 // pred_region
      %s23 = sadd.s32 0, 0
      %p24 = scmp.lt.s32.totalorder %s23, 0
      %s25 = scalar_select %p24, %s23, 0
      %p26 = scmp.lt.s32.totalorder %s25, 0
      %s27 = scalar_select %p26, %s25, 0
      %s28 = smul.addr %s27, 8
      %s29 = scalar_lea.vmem %s1, %s28
      %s30 = sadd.s32 0, 0
      %p31 = scmp.lt.s32.totalorder %s30, 0
      %s32 = scalar_select %p31, %s30, 0
    $region9: #{tpu_custom_call.1} parent=1 // pred_fallthru
      _
    // Predicated region
    $region10: #{tpu_custom_call.1} parent=1 // pred_check
      _
    $region11: #{tpu_custom_call.1} parent=1 // pred_check_branch
      %34 = sbr.rel (0) target = $region13
    $region12: #{tpu_custom_call.1} parent=1 // pred_region
      _
    $region13: #{tpu_custom_call.1} parent=1 // pred_fallthru
      _
    %s35 = sadd.s32 0, 0
    %p36 = scmp.lt.s32.totalorder %s35, 0
    %s37 = scalar_select %p36, %s35, 0
    %p38 = scmp.lt.s32.totalorder %s37, 0
    %s39 = scalar_select %p38, %s37, 0
    %s40 = smul.addr %s39, 8
    %s41 = scalar_lea.vmem %s0, %s40
    %s42 = sadd.s32 0, 0
    %p43 = scmp.lt.s32.totalorder %s42, 0
    %s44 = scalar_select %p43, %s42, 0
    %p45 = scmp.lt.s32.totalorder %s44, 0
    %s46 = scalar_select %p45, %s44, 0
    %s47 = smul.addr %s46, 8
    %s48 = scalar_lea.vmem %s1, %s47
    %s49 = sadd.s32 0, 0
    %p50 = scmp.lt.s32.totalorder %s49, 0
    %s51 = scalar_select %p50, %s49, 0
    %p52 = scmp.lt.s32.totalorder %s51, 0
    %s53 = scalar_select %p52, %s51, 0
    %s54 = smul.addr %s53, 8
    %s55 = scalar_lea.vmem %s0, %s54
    %s56 = sadd.s32 0, 0
    %p57 = scmp.lt.s32.totalorder %s56, 0
    %s58 = scalar_select %p57, %s56, 0
    %s59 = sadd.s32 0, 0
    %p60 = scmp.lt.s32.totalorder %s59, 0
    %s61 = scalar_select %p60, %s59, 0
    %p62 = scmp.lt.s32.totalorder %s61, 0
    %s63 = scalar_select %p62, %s61, 0
    %s64 = smul.addr %s63, 8
    %s65 = scalar_lea.vmem %s1, %s64
    %s66 = sadd.s32 0, 0
    %p67 = scmp.lt.s32.totalorder %s66, 0
    %s68 = scalar_select %p67, %s66, 0
    %p69 = scmp.eq.s32.totalorder 0, 0
    // Predicated region
    $region14: #{tpu_custom_call.1} parent=1 // pred_check
      %p70 = pneg %p69
    $region15: #{tpu_custom_call.1} parent=1 // pred_check_branch
      %72 = sbr.rel (%p70) target = $region17
    $region16: #{tpu_custom_call.1} parent=1 // pred_region
      %vm73 = vcmask 0
      %74 = vst.msk [vmem:[#allocation2] sm:$0x1] %vm73, 0.0
    $region17: #{tpu_custom_call.1} parent=1 // pred_fallthru
      _
    %v75 = vld [vmem:[%s55] sm:$0xff]
    %v76 = vld [vmem:[%s65] sm:$0xff]
    %v77 = vld [vmem:[%s2] sm:$0x1]
    %v78 = vlaneseq
    %v79 = vand.u32 %v78, 127
    %80 = vset.pattern.permute.xlu0 0
    %81 = vperm.xlu0 %80, %v76
    %v82 = vpop.permute.xlu0 %81
    %vm83 = vcmp.eq.s32.totalorder %v79, %v82
    %vm84 = vcmask 130048
    %v85 = vsel %vm84, %v75, -inf
    %86 = vmax.xlane.f32.xlu0 %v85
    %v87 = vpop.xlane.xlu0 %86
    %v88 = vsub.f32 %v75, %v87
    %v89 = vmul.f32 %v88, 1.442695
    %v90 = vpow.pop %v89
    %v91 = vsel %vm84, %v90, 0.0
    %92 = vadd.xlane.f32.xlu0 %v91
    %v93 = vpop.xlane.xlu0 %92
    %v94 = vlog2.pop %v93
    %v95 = vmul.f32 %v94, 0.6931472
    %v96 = vadd.f32 %v95, %v87
    %v97 = vsel %vm83, %v75, 0.0
    %v98 = vsel %vm84, %v97, 0.0
    %99 = vadd.xlane.f32.xlu0 %v98
    %v100 = vpop.xlane.xlu0 %99
    %v101 = vsub.f32 %v96, %v100
    %v102 = vmax.f32 %v101, 0.0
    %v103 = vsub.f32 0.0, %v102
    %v104 = vmul.f32 %v103, 1.442695
    %v105 = vpow.pop %v104
    %v106 = vsub.f32 1.0, %v105
    %v107 = vmax.f32 %v106, 0.0
    %v108 = vmin.f32 %v107, 1.0
    %v109 = vmul.f32 %v108, %v108
    %v110 = vmul.f32 %v109, %v102
    %v112 = vlaneseq
    %v113 = vshrl.u32 %v112, 7
    %v114 = vsub.s32 0, %v113
    %v115 = vrot.slane %v77, %v114
    %v117 = vsel %vm83, %v115, 0.0
    %v118 = vsel %vm84, %v117, 0.0
    %119 = vadd.xlane.f32.xlu0 %v118
    %v120 = vpop.xlane.xlu0 %119
    %v121 = vmul.f32 %v120, %v110
    %s122 = sadd.s32 0, 0
    %s123 = smul.u32 %s122, 8
    %v124 = vlaneseq
    %v125 = vshrl.u32 %v124, 7
    %v126 = vstv %s123
    %v127 = vadd.s32 %v126, %v125
    %vm128 = vcmp.lt.s32.totalorder %v127, 8
    %v129 = vsel %vm128, %v121, 0.0
    %v130 = vld [vmem:[#allocation2] sm:$0x1]
    %v131 = vrot.slane %v129, 4
    %v132 = vadd.f32 %v129, %v131
    %v133 = vrot.slane %v132, 2
    %v134 = vadd.f32 %v132, %v133
    %v135 = vrot.slane %v134, 1
    %v136 = vadd.f32 %v134, %v135
    %v137 = vadd.f32 %v130, %v136
    %vm138 = vcmask 0
    %139 = vst.msk [vmem:[#allocation2] sm:$0x1] %vm138, %v137
    // Predicated region
    $region18: #{tpu_custom_call.1} parent=1 // pred_check
      %p140 = pneg %p69
    $region19: #{tpu_custom_call.1} parent=1 // pred_check_branch
      %142 = sbr.rel (%p140) target = $region21
    $region20: #{tpu_custom_call.1} parent=1 // pred_region
      %v143 = vld [vmem:[#allocation2] sm:$0x1]
      %v145 = vlaneseq
      %v146 = vshrl.u32 %v145, 7
      %v147 = vsub.s32 0, %v146
      %v148 = vrot.slane %v143, %v147
      %149 = vset.pattern.permute.xlu0 0
      %150 = vperm.xlu0 %149, %v148
      %v151 = vpop.permute.xlu0 %150
      %153 = vst [vmem:[#allocation3] sm:$0xff] %v151
    $region21: #{tpu_custom_call.1} parent=1 // pred_fallthru
      _
    // Predicated region
    $region22: #{tpu_custom_call.1} parent=1 // pred_check
      _
    $region23: #{tpu_custom_call.1} parent=1 // pred_check_branch
      %155 = sbr.rel (0) target = $region25
    $region24: #{tpu_custom_call.1} parent=1 // pred_region
      %s157 = ssub.s32 128, 128
      %158 = vsyncadd [#allocation4], %s157
      %s160 = sshll.u32 [#allocation3], 4
      %s161 = int_to_ptr.vmem [resolvable:$true] %s160
      %163 = dma.vmem_to_hbm [thread:$0]  %s161, 128, %s3, [#allocation4]
    $region25: #{tpu_custom_call.1} parent=1 // pred_fallthru
      _
    // Predicated region
    $region26: #{tpu_custom_call.1} parent=1 // pred_check
      _
    $region27: #{tpu_custom_call.1} parent=1 // pred_check_branch
      %165 = sbr.rel (0) target = $region29
    $region28: #{tpu_custom_call.1} parent=1 // pred_region
      %166 = dma.done [#allocation4], 128
    $region29: #{tpu_custom_call.1} parent=1 // pred_fallthru
      _
    %167 = vsyncpa [#allocation4], 1

</llo_original>
